<compile_context>
chip_gen: v6e
topology: v6e:2x2x1
jax: 0.10.0
libtpu: 0.0.40
codegen_flags: <defaults>
</compile_context>

<pallas_src>
import functools

import jax
import jax.numpy as jnp
from jax.experimental import pallas as pl
from jax.experimental.pallas import tpu as pltpu

LN_EPS = 1e-5  # PyTorch nn.LayerNorm default.

# Working-set budget kept under ~24 MiB so one tiling fits every generation:
# v5e (16 MiB default scoped, 128 MiB phys -> scoped limit raised explicitly),
# v6e (32 MiB scoped / 128 MiB phys), v7x (32 MiB scoped / 64 MiB phys).
_VMEM_TILE_BUDGET = 24 << 20
_VMEM_LIMIT_BYTES = 32 << 20


def _embed_kernel(x_ref, g1_ref, b1_ref, w_ref, bias_ref, g2_ref, posb_ref,
                  o_ref, *, tm, tiles_per_batch):
    """Fused LN(P) -> Linear(P,D) (bf16 MXU, f32 acc) -> LN(D) -> +(beta2+pos)."""
    x = x_ref[...].astype(jnp.float32)                           # (TM, P)

    # LayerNorm over patch_dim: two-pass variance (robust to large means).
    mu = jnp.mean(x, axis=-1, keepdims=True)
    xc = x - mu
    var = jnp.mean(xc * xc, axis=-1, keepdims=True)
    xn = xc * jax.lax.rsqrt(var + LN_EPS)
    xn = xn * g1_ref[...] + b1_ref[...]                          # (TM, P) f32

    # Linear(P -> D): bf16 operands on the MXU, f32 accumulation.
    y = jnp.dot(xn.astype(jnp.bfloat16), w_ref[...],
                preferred_element_type=jnp.float32)
    y = y + bias_ref[...]                                        # (TM, D) f32

    # LayerNorm over dim: two-pass variance.
    mu2 = jnp.mean(y, axis=-1, keepdims=True)
    yc = y - mu2
    var2 = jnp.mean(yc * yc, axis=-1, keepdims=True)
    yn = yc * jax.lax.rsqrt(var2 + LN_EPS)

    # Slice this tile's rows of the VMEM-resident (beta2 + pos) table.
    if tiles_per_batch > 1:
        off = (pl.program_id(0) % tiles_per_batch) * tm
        posb = posb_ref[pl.ds(pl.multiple_of(off, 8), tm), :]
    else:
        posb = posb_ref[...]                                     # (TM, D)

    o_ref[...] = (yn * g2_ref[...] + posb).astype(o_ref.dtype)


def _choose_tiling(B, N, P, D, out_itemsize, max_tm):
    """Pick (n_pad, tm): tm multiple of 8, (B * n_pad) % tm == 0, fits VMEM."""
    n_pad = -(-N // 8) * 8

    def fits(tm):
        stream = 2 * tm * (P * 2 + D * out_itemsize)        # x (bf16) + out, 2 bufs
        const = (2 * P * D * 2                                # W bf16, 2 bufs
                 + 2 * max(tm, n_pad) * D * 4                 # resident pos+beta
                 + 2 * (2 * P + 2 * D) * 4)                   # g1,b1,bias,g2
        return stream + const <= _VMEM_TILE_BUDGET

    cap = max(8, max_tm - max_tm % 8)
    while cap > 8 and not fits(cap):
        cap -= 8

    if n_pad <= cap:
        # One tile spans k whole (padded) batches; k is a divisor of B.
        k = 1
        for cand in range(min(B, cap // n_pad), 0, -1):
            if B % cand == 0:
                k = cand
                break
        return n_pad, k * n_pad

    # Tile within a (padded) batch: prefer a large multiple-of-8 divisor of
    # n_pad; otherwise pad n_pad up to a multiple of the cap.
    floor = min(cap, 128)
    for tm in range(cap, floor - 1, -8):
        if n_pad % tm == 0:
            return n_pad, tm
    n_pad = -(-n_pad // cap) * cap
    return n_pad, cap


@functools.partial(jax.jit,
                   static_argnames=("patch_size", "out_dtype", "max_tm"))
def image_embedder_forward(img, params, *, patch_size,
                           out_dtype=jnp.float32, max_tm=1024):
    """img: (B, 3, H, W) float32. Returns (B, N+1, dim) in out_dtype."""
    B, C, H, W = img.shape
    p = patch_size
    h, w = H // p, W // p
    N = h * w
    P = C * p * p
    D = params["w"].shape[1]

    # --- XLA glue: patchify in '(c p1 p2)' feature order (cheaper transpose than
    # the '(p1 p2 c)' einops order; params permuted to match below) + bf16 cast.
    x = img.astype(jnp.bfloat16).reshape(B, C, h, p, w, p)
    x = jnp.transpose(x, (0, 2, 4, 1, 3, 5))                    # (B,h,w,C,p1,p2)
    patches = x.reshape(B, N, P)

    # Permute LN1/W params from '(p1 p2 c)' to '(c p1 p2)' feature order.
    ln1_g = params["ln1_g"].reshape(p, p, C).transpose(2, 0, 1).reshape(1, P)
    ln1_b = params["ln1_b"].reshape(p, p, C).transpose(2, 0, 1).reshape(1, P)
    w_bf16 = (params["w"].reshape(p, p, C, D).transpose(2, 0, 1, 3)
              .reshape(P, D).astype(jnp.bfloat16))

    out_itemsize = jnp.dtype(out_dtype).itemsize
    n_pad, tm = _choose_tiling(B, N, P, D, out_itemsize, max_tm)
    assert tm % 8 == 0 and (B * n_pad) % tm == 0

    if n_pad != N:
        patches = jnp.pad(patches, ((0, 0), (0, n_pad - N), (0, 0)))
    patches = patches.reshape(B * n_pad, P)

    # beta2 + patch positional rows, padded (and tiled if one tile spans several
    # batches) so it can sit VMEM-resident and be sliced per grid step.
    pos_beta = params["pos_embedding"][0, 1:N + 1] + params["ln2_b"][None, :]
    if n_pad != N:
        pos_beta = jnp.pad(pos_beta, ((0, n_pad - N), (0, 0)))
    if tm > n_pad:
        pos_beta = jnp.tile(pos_beta, (tm // n_pad, 1))
    pos_rows = pos_beta.shape[0]
    tiles_per_batch = pos_rows // tm
    assert pos_rows % tm == 0

    grid = (B * n_pad // tm,)

    patch_out = pl.pallas_call(
        functools.partial(_embed_kernel, tm=tm,
                          tiles_per_batch=tiles_per_batch),
        out_shape=jax.ShapeDtypeStruct((B * n_pad, D), out_dtype),
        grid_spec=pltpu.PrefetchScalarGridSpec(
            num_scalar_prefetch=0,
            grid=grid,
            in_specs=[
                pl.BlockSpec((tm, P), lambda i: (i, 0)),         # tokens (bf16)
                pl.BlockSpec((1, P), lambda i: (0, 0)),          # ln1 gamma
                pl.BlockSpec((1, P), lambda i: (0, 0)),          # ln1 beta
                pl.BlockSpec((P, D), lambda i: (0, 0)),          # W (bf16)
                pl.BlockSpec((1, D), lambda i: (0, 0)),          # linear bias
                pl.BlockSpec((1, D), lambda i: (0, 0)),          # ln2 gamma
                pl.BlockSpec((pos_rows, D), lambda i: (0, 0)),   # beta2+pos (resident)
            ],
            out_specs=pl.BlockSpec((tm, D), lambda i: (i, 0)),
        ),
        compiler_params=pltpu.CompilerParams(
            dimension_semantics=("parallel",),
            vmem_limit_bytes=_VMEM_LIMIT_BYTES),
    )(
        patches,
        ln1_g, ln1_b,
        w_bf16, params["b"].reshape(1, D),
        params["ln2_g"].reshape(1, D),
        pos_beta,
    )

    # cls row: cls_token + pos_embedding[:, 0], broadcast over batch (XLA glue).
    cls_row = (params["cls_token"][0, 0] + params["pos_embedding"][0, 0])
    cls_rows = jnp.broadcast_to(cls_row[None, None, :], (B, 1, D)).astype(out_dtype)
    out = jnp.concatenate(
        [cls_rows, patch_out.reshape(B, n_pad, D)[:, :N]], axis=1)
    # dropout(p=0.0) is the identity.
    return out


def init_params(key, *, dim, image_size, patch_size):
    num_patches = (image_size // patch_size) ** 2
    patch_dim = 3 * patch_size ** 2
    k1, k2, k3, k4 = jax.random.split(key, 4)
    bound = 1.0 / jnp.sqrt(patch_dim)  # nn.Linear default init bound
    return {
        "ln1_g": jnp.ones((patch_dim,), jnp.float32),
        "ln1_b": jnp.zeros((patch_dim,), jnp.float32),
        "w": jax.random.uniform(k1, (patch_dim, dim), jnp.float32, -bound, bound),
        "b": jax.random.uniform(k2, (dim,), jnp.float32, -bound, bound),
        "ln2_g": jnp.ones((dim,), jnp.float32),
        "ln2_b": jnp.zeros((dim,), jnp.float32),
        "pos_embedding": jax.random.normal(
            k3, (1, num_patches + 1, dim), jnp.float32),
        "cls_token": jax.random.normal(k4, (1, 1, dim), jnp.float32),
    }


def _reference(img, params, patch_size):
    """Pure-JAX reference in the original '(p1 p2 c)' PyTorch ordering, with the
    same bf16 input / bf16-MXU precision choices as the kernel (f32 accum)."""
    B, C, H, W = img.shape
    p = patch_size
    h, w = H // p, W // p
    N = h * w
    D = params["w"].shape[1]
    patches = img.reshape(B, C, h, p, w, p).transpose(0, 2, 4, 3, 5, 1)
    patches = patches.reshape(B, N, C * p * p)
    x = patches.astype(jnp.bfloat16).astype(jnp.float32)
    mu = x.mean(-1, keepdims=True)
    xc = x - mu
    var = (xc * xc).mean(-1, keepdims=True)
    xn = xc * jax.lax.rsqrt(var + LN_EPS)
    xn = xn * params["ln1_g"] + params["ln1_b"]
    y = jnp.dot(xn.astype(jnp.bfloat16), params["w"].astype(jnp.bfloat16),
                preferred_element_type=jnp.float32) + params["b"]
    mu2 = y.mean(-1, keepdims=True)
    yc = y - mu2
    var2 = (yc * yc).mean(-1, keepdims=True)
    yn = yc * jax.lax.rsqrt(var2 + LN_EPS)
    yn = yn * params["ln2_g"] + params["ln2_b"]
    out = jnp.concatenate(
        [jnp.broadcast_to(params["cls_token"], (B, 1, D)), yn], axis=1)
    return out + params["pos_embedding"][:, :N + 1]


if __name__ == "__main__":
    # NOTE: demo shapes are tiny (P=48, D=128); tile/pipeline tuning conclusions
    # only transfer at realistic ViT dims (P/D ~768, N ~196+).
    dim, patch_size = 128, 4
    B = 2
    key = jax.random.PRNGKey(0)
    k_img, k_par, k_img2 = jax.random.split(key, 3)

    # Config 1: aligned N (image 16 -> N=16), one 32-row tile spanning both batches.
    image_size = 16
    img = jax.random.normal(k_img, (B, 3, image_size, image_size), jnp.float32)
    params = init_params(k_par, dim=dim, image_size=image_size,
                         patch_size=patch_size)
    out = jax.block_until_ready(
        image_embedder_forward(img, params, patch_size=patch_size))
    ref = _reference(img, params, patch_size)
    assert out.shape == (B, (image_size // patch_size) ** 2 + 1, dim)
    err = float(jnp.max(jnp.abs(out - ref)))
    assert jnp.allclose(out, ref, atol=5e-3, rtol=5e-3), err

    # Config 2: ragged N (image 20 -> N=25, padded to 32) -> exercises padding.
    image_size2 = 20
    img2 = jax.random.normal(k_img2, (B, 3, image_size2, image_size2), jnp.float32)
    params2 = init_params(k_par, dim=dim, image_size=image_size2,
                          patch_size=patch_size)
    out2 = jax.block_until_ready(
        image_embedder_forward(img2, params2, patch_size=patch_size))
    ref2 = _reference(img2, params2, patch_size)
    assert out2.shape == (B, 26, dim)
    err2 = float(jnp.max(jnp.abs(out2 - ref2)))
    assert jnp.allclose(out2, ref2, atol=5e-3, rtol=5e-3), err2

    # Config 3: force small tiles (max_tm=16) -> multiple tiles per batch, which
    # exercises the in-kernel dynamic slice of the VMEM-resident pos table.
    out3 = jax.block_until_ready(
        image_embedder_forward(img2, params2, patch_size=patch_size, max_tm=16))
    err3 = float(jnp.max(jnp.abs(out3 - ref2)))
    assert jnp.allclose(out3, ref2, atol=5e-3, rtol=5e-3), err3

    print("KERNEL_OK")
</pallas_src>

<mosaic_0001>
module attributes {stable_mosaic.version = 11 : i64} {
  func.func @_embed_kernel(%arg0: i32, %arg1: memref<32x48xbf16, #tpu.memory_space<vmem>>, %arg2: memref<1x48xf32, #tpu.memory_space<vmem>>, %arg3: memref<1x48xf32, #tpu.memory_space<vmem>>, %arg4: memref<48x128xbf16, #tpu.memory_space<vmem>>, %arg5: memref<1x128xf32, #tpu.memory_space<vmem>>, %arg6: memref<1x128xf32, #tpu.memory_space<vmem>>, %arg7: memref<32x128xf32, #tpu.memory_space<vmem>>, %arg8: memref<32x128xf32, #tpu.memory_space<vmem>>) attributes {dimension_semantics = [#tpu.dimension_semantics<parallel>], iteration_bounds = array<i64: 1>, scalar_prefetch = 0 : i64, scratch_operands = 0 : i64, tpu.core_type = #tpu.core_type<tc>, window_params = [{transform_indices = @transform_0, window_bounds = array<i64: 32, 48>}, {pipeline_mode = #tpu.pipeline_mode<synchronous>, transform_indices = @transform_1, window_bounds = array<i64: 1, 48>}, {pipeline_mode = #tpu.pipeline_mode<synchronous>, transform_indices = @transform_2, window_bounds = array<i64: 1, 48>}, {pipeline_mode = #tpu.pipeline_mode<synchronous>, transform_indices = @transform_3, window_bounds = array<i64: 48, 128>}, {pipeline_mode = #tpu.pipeline_mode<synchronous>, transform_indices = @transform_4, window_bounds = array<i64: 1, 128>}, {pipeline_mode = #tpu.pipeline_mode<synchronous>, transform_indices = @transform_5, window_bounds = array<i64: 1, 128>}, {pipeline_mode = #tpu.pipeline_mode<synchronous>, transform_indices = @transform_6, window_bounds = array<i64: 32, 128>}, {transform_indices = @transform_7, window_bounds = array<i64: 32, 128>}]} {
    %c0 = arith.constant 0 : index
    %c0_0 = arith.constant 0 : index
    %0 = vector.load %arg1[%c0, %c0_0] : memref<32x48xbf16, #tpu.memory_space<vmem>>, vector<32x48xbf16>
    %1 = arith.extf %0 : vector<32x48xbf16> to vector<32x48xf32>
    %cst = arith.constant dense<0.000000e+00> : vector<32xf32>
    %2 = vector.multi_reduction <add>, %1, %cst [1] : vector<32x48xf32> to vector<32xf32>
    %3 = vector.shape_cast %2 : vector<32xf32> to vector<32x1xf32>
    %cst_1 = arith.constant 4.800000e+01 : f32
    %4 = vector.broadcast %cst_1 : f32 to vector<32x1xf32>
    %5 = arith.divf %3, %4 : vector<32x1xf32>
    %6 = vector.broadcast %5 : vector<32x1xf32> to vector<32x48xf32>
    %7 = arith.subf %1, %6 : vector<32x48xf32>
    %8 = arith.mulf %7, %7 : vector<32x48xf32>
    %cst_2 = arith.constant dense<0.000000e+00> : vector<32xf32>
    %9 = vector.multi_reduction <add>, %8, %cst_2 [1] : vector<32x48xf32> to vector<32xf32>
    %10 = vector.shape_cast %9 : vector<32xf32> to vector<32x1xf32>
    %cst_3 = arith.constant 4.800000e+01 : f32
    %11 = vector.broadcast %cst_3 : f32 to vector<32x1xf32>
    %12 = arith.divf %10, %11 : vector<32x1xf32>
    %cst_4 = arith.constant 9.99999974E-6 : f32
    %13 = vector.broadcast %cst_4 : f32 to vector<32x1xf32>
    %14 = arith.addf %12, %13 : vector<32x1xf32>
    %15 = math.rsqrt %14 : vector<32x1xf32>
    %16 = vector.broadcast %15 : vector<32x1xf32> to vector<32x48xf32>
    %17 = arith.mulf %7, %16 : vector<32x48xf32>
    %c0_5 = arith.constant 0 : index
    %c0_6 = arith.constant 0 : index
    %18 = vector.load %arg2[%c0_5, %c0_6] : memref<1x48xf32, #tpu.memory_space<vmem>>, vector<1x48xf32>
    %19 = vector.broadcast %18 : vector<1x48xf32> to vector<32x48xf32>
    %20 = arith.mulf %17, %19 : vector<32x48xf32>
    %c0_7 = arith.constant 0 : index
    %c0_8 = arith.constant 0 : index
    %21 = vector.load %arg3[%c0_7, %c0_8] : memref<1x48xf32, #tpu.memory_space<vmem>>, vector<1x48xf32>
    %22 = vector.broadcast %21 : vector<1x48xf32> to vector<32x48xf32>
    %23 = arith.addf %20, %22 : vector<32x48xf32>
    %24 = arith.truncf %23 : vector<32x48xf32> to vector<32x48xbf16>
    %c0_9 = arith.constant 0 : index
    %c0_10 = arith.constant 0 : index
    %25 = vector.load %arg4[%c0_9, %c0_10] : memref<48x128xbf16, #tpu.memory_space<vmem>>, vector<48x128xbf16>
    %cst_11 = arith.constant dense<0.000000e+00> : vector<32x128xf32>
    %26 = tpu.matmul %24, %25, %cst_11 {dimension_numbers = #tpu.dot_dimension_numbers<[1], [0], [0], [1], [0, 0, 1, 1], [], []>} : vector<32x48xbf16>, vector<48x128xbf16>, vector<32x128xf32> -> vector<32x128xf32>
    %c0_12 = arith.constant 0 : index
    %c0_13 = arith.constant 0 : index
    %27 = vector.load %arg5[%c0_12, %c0_13] : memref<1x128xf32, #tpu.memory_space<vmem>>, vector<1x128xf32>
    %28 = vector.broadcast %27 : vector<1x128xf32> to vector<32x128xf32>
    %29 = arith.addf %26, %28 : vector<32x128xf32>
    %cst_14 = arith.constant dense<0.000000e+00> : vector<32xf32>
    %30 = vector.multi_reduction <add>, %29, %cst_14 [1] : vector<32x128xf32> to vector<32xf32>
    %31 = vector.shape_cast %30 : vector<32xf32> to vector<32x1xf32>
    %cst_15 = arith.constant 1.280000e+02 : f32
    %32 = vector.broadcast %cst_15 : f32 to vector<32x1xf32>
    %33 = arith.divf %31, %32 : vector<32x1xf32>
    %34 = vector.broadcast %33 : vector<32x1xf32> to vector<32x128xf32>
    %35 = arith.subf %29, %34 : vector<32x128xf32>
    %36 = arith.mulf %35, %35 : vector<32x128xf32>
    %cst_16 = arith.constant dense<0.000000e+00> : vector<32xf32>
    %37 = vector.multi_reduction <add>, %36, %cst_16 [1] : vector<32x128xf32> to vector<32xf32>
    %38 = vector.shape_cast %37 : vector<32xf32> to vector<32x1xf32>
    %cst_17 = arith.constant 1.280000e+02 : f32
    %39 = vector.broadcast %cst_17 : f32 to vector<32x1xf32>
    %40 = arith.divf %38, %39 : vector<32x1xf32>
    %cst_18 = arith.constant 9.99999974E-6 : f32
    %41 = vector.broadcast %cst_18 : f32 to vector<32x1xf32>
    %42 = arith.addf %40, %41 : vector<32x1xf32>
    %43 = math.rsqrt %42 : vector<32x1xf32>
    %44 = vector.broadcast %43 : vector<32x1xf32> to vector<32x128xf32>
    %45 = arith.mulf %35, %44 : vector<32x128xf32>
    %c0_19 = arith.constant 0 : index
    %c0_20 = arith.constant 0 : index
    %46 = vector.load %arg7[%c0_19, %c0_20] : memref<32x128xf32, #tpu.memory_space<vmem>>, vector<32x128xf32>
    %c0_21 = arith.constant 0 : index
    %c0_22 = arith.constant 0 : index
    %47 = vector.load %arg6[%c0_21, %c0_22] : memref<1x128xf32, #tpu.memory_space<vmem>>, vector<1x128xf32>
    %48 = vector.broadcast %47 : vector<1x128xf32> to vector<32x128xf32>
    %49 = arith.mulf %45, %48 : vector<32x128xf32>
    %50 = arith.addf %49, %46 : vector<32x128xf32>
    %c0_23 = arith.constant 0 : index
    %c0_24 = arith.constant 0 : index
    %51 = vector.load %arg8[%c0_23, %c0_24] : memref<32x128xf32, #tpu.memory_space<vmem>>, vector<32x128xf32>
    tpu.vector_store %arg8[%c0_23, %c0_24], %50 {strides = array<i32>} : memref<32x128xf32, #tpu.memory_space<vmem>>, vector<32x128xf32>,
    return
  }
  func.func @transform_0(%arg0: i32) -> (i32, i32) {
    %c0_i32 = arith.constant 0 : i32
    %c0_i32_0 = arith.constant 0 : i32
    return %arg0, %c0_i32 : i32, i32
  }
  func.func @transform_1(%arg0: i32) -> (i32, i32) {
    %c0_i32 = arith.constant 0 : i32
    %c0_i32_0 = arith.constant 0 : i32
    %c0_i32_1 = arith.constant 0 : i32
    return %c0_i32, %c0_i32_0 : i32, i32
  }
  func.func @transform_2(%arg0: i32) -> (i32, i32) {
    %c0_i32 = arith.constant 0 : i32
    %c0_i32_0 = arith.constant 0 : i32
    %c0_i32_1 = arith.constant 0 : i32
    return %c0_i32, %c0_i32_0 : i32, i32
  }
  func.func @transform_3(%arg0: i32) -> (i32, i32) {
    %c0_i32 = arith.constant 0 : i32
    %c0_i32_0 = arith.constant 0 : i32
    %c0_i32_1 = arith.constant 0 : i32
    return %c0_i32, %c0_i32_0 : i32, i32
  }
  func.func @transform_4(%arg0: i32) -> (i32, i32) {
    %c0_i32 = arith.constant 0 : i32
    %c0_i32_0 = arith.constant 0 : i32
    %c0_i32_1 = arith.constant 0 : i32
    return %c0_i32, %c0_i32_0 : i32, i32
  }
  func.func @transform_5(%arg0: i32) -> (i32, i32) {
    %c0_i32 = arith.constant 0 : i32
    %c0_i32_0 = arith.constant 0 : i32
    %c0_i32_1 = arith.constant 0 : i32
    return %c0_i32, %c0_i32_0 : i32, i32
  }
  func.func @transform_6(%arg0: i32) -> (i32, i32) {
    %c0_i32 = arith.constant 0 : i32
    %c0_i32_0 = arith.constant 0 : i32
    %c0_i32_1 = arith.constant 0 : i32
    return %c0_i32, %c0_i32_0 : i32, i32
  }
  func.func @transform_7(%arg0: i32) -> (i32, i32) {
    %c0_i32 = arith.constant 0 : i32
    %c0_i32_0 = arith.constant 0 : i32
    return %arg0, %c0_i32 : i32, i32
  }
}

</mosaic_0001>

<llo_original>
// kernel: image_embedder_forward.1
$region0: #{image_embedder_forward.1}
  #allocation0 [shape = 'u32[]', space=smem, size = 0x4, offset = 0x4, fixed_abs, tag = 'smem constant byte address 0x4 - core index']
  #allocation1 [shape = 'u32[144,128]{1,0:T(1,128)}', space=vmem, size = 0x12000, scoped, tag = 'internal scratch']
  %s0 = inlined_call_operand.vmem [shape: bf16[32,48], index: 0, kind: input, shape index: {}]
  %s1 = inlined_call_operand.vmem [shape: f32[1,48], index: 1, kind: input, shape index: {}]
  %s2 = inlined_call_operand.vmem [shape: f32[1,48], index: 2, kind: input, shape index: {}]
  %s3 = inlined_call_operand.vmem [shape: bf16[48,128], index: 3, kind: input, shape index: {}]
  %s4 = inlined_call_operand.vmem [shape: f32[1,128], index: 4, kind: input, shape index: {}]
  %s5 = inlined_call_operand.vmem [shape: f32[1,128], index: 5, kind: input, shape index: {}]
  %s6 = inlined_call_operand.vmem [shape: f32[32,128], index: 6, kind: input, shape index: {}]
  %s7 = inlined_call_operand.vmem [shape: f32[32,128], index: 7, kind: output, shape index: {}]
  %s8 = sld [smem:[#allocation0]]
  $region38: #{image_embedder_forward.1} parent=0
    _
  %s10 = ssub.s32 1, %s8
  %s11 = scalar_select 0, %s10, %s8
  // Predicated region
  $region2: #{image_embedder_forward.1} parent=0 // pred_check
    _
  $region3: #{image_embedder_forward.1} parent=0 // pred_check_branch
    %13 = sbr.rel (0) target = $region5
  $region4: #{image_embedder_forward.1} parent=0 // pred_region
    _
  $region5: #{image_embedder_forward.1} parent=0 // pred_fallthru
    _
  // Predicated region
  $region6: #{image_embedder_forward.1} parent=0 // pred_check
    _
  $region7: #{image_embedder_forward.1} parent=0 // pred_check_branch
    %15 = sbr.rel (0) target = $region9
  $region8: #{image_embedder_forward.1} parent=0 // pred_region
    _
  $region9: #{image_embedder_forward.1} parent=0 // pred_fallthru
    _
  // Predicated region
  $region10: #{image_embedder_forward.1} parent=0 // pred_check
    _
  $region11: #{image_embedder_forward.1} parent=0 // pred_check_branch
    %17 = sbr.rel (0) target = $region13
  $region12: #{image_embedder_forward.1} parent=0 // pred_region
    _
  $region13: #{image_embedder_forward.1} parent=0 // pred_fallthru
    _
  // Predicated region
  $region14: #{image_embedder_forward.1} parent=0 // pred_check
    _
  $region15: #{image_embedder_forward.1} parent=0 // pred_check_branch
    %19 = sbr.rel (0) target = $region17
  $region16: #{image_embedder_forward.1} parent=0 // pred_region
    _
  $region17: #{image_embedder_forward.1} parent=0 // pred_fallthru
    _
  // Predicated region
  $region18: #{image_embedder_forward.1} parent=0 // pred_check
    _
  $region19: #{image_embedder_forward.1} parent=0 // pred_check_branch
    %21 = sbr.rel (0) target = $region21
  $region20: #{image_embedder_forward.1} parent=0 // pred_region
    _
  $region21: #{image_embedder_forward.1} parent=0 // pred_fallthru
    _
  // Predicated region
  $region22: #{image_embedder_forward.1} parent=0 // pred_check
    _
  $region23: #{image_embedder_forward.1} parent=0 // pred_check_branch
    %23 = sbr.rel (0) target = $region25
  $region24: #{image_embedder_forward.1} parent=0 // pred_region
    _
  $region25: #{image_embedder_forward.1} parent=0 // pred_fallthru
    _
  // Predicated region
  $region26: #{image_embedder_forward.1} parent=0 // pred_check
    _
  $region27: #{image_embedder_forward.1} parent=0 // pred_check_branch
    %25 = sbr.rel (0) target = $region29
  $region28: #{image_embedder_forward.1} parent=0 // pred_region
    _
  $region29: #{image_embedder_forward.1} parent=0 // pred_fallthru
    _
  %v27 = vld [vmem:[%s0] sm:$0xf]
  %v28 = vld [vmem:[%s0 + $0x4] sm:$0xf]
  %v29 = vld [vmem:[%s0 + $0x8] sm:$0xf]
  %v30 = vld [vmem:[%s0 + $0xc] sm:$0xf]
  %v31 = vunpack.c.l.bf16 %v27
  %v32 = vunpack.c.l.bf16 %v28
  %v33 = vunpack.c.l.bf16 %v29
  %v34 = vunpack.c.l.bf16 %v30
  %vm35 = vcmask 392192
  %v36 = vsel %vm35, %v31, 0.0
  %37 = vadd.xlane.f32.xlu0 %v36
  %v38 = vpop.xlane.xlu0 %37
  %v39 = vsel %vm35, %v32, 0.0
  %40 = vadd.xlane.f32.xlu0 %v39
  %v41 = vpop.xlane.xlu0 %40
  %v42 = vsel %vm35, %v33, 0.0
  %43 = vadd.xlane.f32.xlu0 %v42
  %v44 = vpop.xlane.xlu0 %43
  %v45 = vsel %vm35, %v34, 0.0
  %46 = vadd.xlane.f32.xlu0 %v45
  %v47 = vpop.xlane.xlu0 %46
  %v48 = vrcp.pop 48.0
  %v49 = vmul.f32 %v38, %v48
  %v50 = vmul.f32 %v41, %v48
  %v51 = vmul.f32 %v44, %v48
  %v52 = vmul.f32 %v47, %v48
  %v53 = vsub.f32 %v31, %v49
  %v54 = vsub.f32 %v32, %v50
  %v55 = vsub.f32 %v33, %v51
  %v56 = vsub.f32 %v34, %v52
  %v57 = vmul.f32 %v53, %v53
  %v58 = vmul.f32 %v54, %v54
  %v59 = vmul.f32 %v55, %v55
  %v60 = vmul.f32 %v56, %v56
  %v61 = vsel %vm35, %v57, 0.0
  %62 = vadd.xlane.f32.xlu0 %v61
  %v63 = vpop.xlane.xlu0 %62
  %v64 = vsel %vm35, %v58, 0.0
  %65 = vadd.xlane.f32.xlu0 %v64
  %v66 = vpop.xlane.xlu0 %65
  %v67 = vsel %vm35, %v59, 0.0
  %68 = vadd.xlane.f32.xlu0 %v67
  %v69 = vpop.xlane.xlu0 %68
  %v70 = vsel %vm35, %v60, 0.0
  %71 = vadd.xlane.f32.xlu0 %v70
  %v72 = vpop.xlane.xlu0 %71
  %v73 = vmul.f32 %v63, %v48
  %v74 = vmul.f32 %v66, %v48
  %v75 = vmul.f32 %v69, %v48
  %v76 = vmul.f32 %v72, %v48
  %v77 = vadd.f32 %v73, 1e-05
  %v78 = vadd.f32 %v74, 1e-05
  %v79 = vadd.f32 %v75, 1e-05
  %v80 = vadd.f32 %v76, 1e-05
  %v81 = vrsqrt.pop %v77
  %v82 = vrsqrt.pop %v78
  %v83 = vrsqrt.pop %v79
  %v84 = vrsqrt.pop %v80
  %v85 = vmul.f32 %v53, %v81
  %v86 = vmul.f32 %v54, %v82
  %v87 = vmul.f32 %v55, %v83
  %v88 = vmul.f32 %v56, %v84
  %v89 = vld [vmem:[%s1] sm:$0x1]
  %v91 = vlaneseq
  %v92 = vshrl.u32 %v91, 7
  %v93 = vsub.s32 0, %v92
  %v94 = vrot.slane %v89, %v93
  %v96 = vmul.f32 %v85, %v94
  %v97 = vmul.f32 %v86, %v94
  %v98 = vmul.f32 %v87, %v94
  %v99 = vmul.f32 %v88, %v94
  %v100 = vld [vmem:[%s2] sm:$0x1]
  %v102 = vlaneseq
  %v103 = vshrl.u32 %v102, 7
  %v104 = vsub.s32 0, %v103
  %v105 = vrot.slane %v100, %v104
  %v107 = vadd.f32 %v96, %v105
  %v108 = vadd.f32 %v97, %v105
  %v109 = vadd.f32 %v98, %v105
  %v110 = vadd.f32 %v99, %v105
  %v111 = vpack.c.bf16 %v108, %v107
  %v112 = vpack.c.bf16 %v110, %v109
  %v113 = vld [vmem:[%s3] sm:$0xf]
  %v114 = vld [vmem:[%s3 + $0x4] sm:$0xf]
  %v115 = vld [vmem:[%s3 + $0x8] sm:$0xf]
  %v116 = vld [vmem:[%s3 + $0xc] sm:$0xf]
  %v117 = vld [vmem:[%s3 + $0x10] sm:$0xf]
  %v118 = vld [vmem:[%s3 + $0x14] sm:$0xf]
  %v119 = vld [vmem:[%s4] sm:$0x1]
  %v121 = vlaneseq
  %v122 = vshrl.u32 %v121, 7
  %v123 = vsub.s32 0, %v122
  %v124 = vrot.slane %v119, %v123
  %v132 = vunpack.c.l.b16 %v113
  %v133 = vunpack.c.l.b16 %v114
  %v134 = vunpack.c.l.b16 %v115
  %v135 = vunpack.c.l.b16 %v116
  %v136 = vunpack.c.l.b16 %v117
  %v137 = vunpack.c.l.b16 %v118
  %v138 = vpack.c.b16 %v133, %v132
  %v139 = vpack.c.b16 %v135, %v134
  %v140 = vpack.c.b16 %v137, %v136
  %v145 = vsel %vm35, %v111, 0
  %v148 = vsel %vm35, %v112, 0
  %150 = vmatprep.subr.bf16.mxu0 0
  %151 = vmatpush1.bf16.msra.mxu0 0
  %152 = vmatprep.subr.bf16.mxu0 0
  %153 = vmatpush1.bf16.msra.mxu0 0
  %154 = vmatprep.subr.bf16.mxu0 0
  %155 = vmatpush1.bf16.msra.mxu0 0
  %156 = vmatprep.subr.bf16.mxu0 0
  %157 = vmatpush1.bf16.msra.mxu0 0
  %158 = vmatprep.subr.bf16.mxu0 0
  %159 = vmatpush1.bf16.msra.mxu0 0
  %160 = vmatprep.subr.bf16.mxu0 0
  %161 = vmatpush1.bf16.msra.mxu0 %v140
  %162 = vmatprep.subr.bf16.mxu0 0
  %163 = vmatpush1.bf16.msra.mxu0 %v139
  %164 = vmatprep.subr.bf16.mxu0 0
  %165 = vmatpush1.bf16.msra.mxu0 %v138
  %166 = vmatprep.subr.bf16.mxu0 0
  %167 = vmatpush2.bf16.msra.mxu0 0
  %168 = vmatprep.subr.bf16.mxu0 0
  %169 = vmatpush2.bf16.msra.mxu0 0
  %170 = vmatprep.subr.bf16.mxu0 0
  %171 = vmatpush2.bf16.msra.mxu0 0
  %172 = vmatprep.subr.bf16.mxu0 0
  %173 = vmatpush2.bf16.msra.mxu0 0
  %174 = vmatprep.subr.bf16.mxu0 0
  %175 = vmatpush2.bf16.msra.mxu0 0
  %176 = vmatprep.subr.bf16.mxu0 0
  %177 = vmatpush2.bf16.msra.mxu0 0
  %178 = vmatprep.subr.bf16.mxu0 0
  %179 = vmatpush2.bf16.msra.mxu0 0
  %180 = vmatprep.subr.bf16.mxu0 0
  %181 = vmatpush2.bf16.msra.mxu0 0
  %182 = vmatprep.mubr.bf16.mxu0 0
  %183 = vmatmul.mubr.bf16.gmra.mxu0 %v145
  %v184 = vpop.f32.mrf.mxu0
  %v185 = vadd.f32 %v124, %v184
  %v186 = vpop.f32.mrf.mxu0
  %v187 = vpop.f32.mrf.mxu0
  %v188 = vadd.f32 %v124, %v187
  %v189 = vpop.f32.mrf.mxu0
  %190 = vmatprep.mubr.bf16.mxu0 0
  %191 = vmatmul.mubr.bf16.gmra.mxu0 %v148
  %v192 = vpop.f32.mrf.mxu0
  %v193 = vadd.f32 %v124, %v192
  %v194 = vpop.f32.mrf.mxu0
  %v195 = vpop.f32.mrf.mxu0
  %v196 = vadd.f32 %v124, %v195
  %v197 = vpop.f32.mrf.mxu0
  %198 = vdwg.mxu0
  %199 = vadd.xlane.f32.xlu0 %v185
  %v200 = vpop.xlane.xlu0 %199
  %201 = vadd.xlane.f32.xlu0 %v188
  %v202 = vpop.xlane.xlu0 %201
  %203 = vadd.xlane.f32.xlu0 %v193
  %v204 = vpop.xlane.xlu0 %203
  %205 = vadd.xlane.f32.xlu0 %v196
  %v206 = vpop.xlane.xlu0 %205
  %v207 = vrcp.pop 128.0
  %v208 = vmul.f32 %v200, %v207
  %v209 = vmul.f32 %v202, %v207
  %v210 = vmul.f32 %v204, %v207
  %v211 = vmul.f32 %v206, %v207
  %v212 = vsub.f32 %v185, %v208
  %v213 = vsub.f32 %v188, %v209
  %v214 = vsub.f32 %v193, %v210
  %v215 = vsub.f32 %v196, %v211
  %v216 = vmul.f32 %v212, %v212
  %v217 = vmul.f32 %v213, %v213
  %v218 = vmul.f32 %v214, %v214
  %v219 = vmul.f32 %v215, %v215
  %220 = vadd.xlane.f32.xlu0 %v216
  %v221 = vpop.xlane.xlu0 %220
  %222 = vadd.xlane.f32.xlu0 %v217
  %v223 = vpop.xlane.xlu0 %222
  %224 = vadd.xlane.f32.xlu0 %v218
  %v225 = vpop.xlane.xlu0 %224
  %226 = vadd.xlane.f32.xlu0 %v219
  %v227 = vpop.xlane.xlu0 %226
  %v228 = vmul.f32 %v221, %v207
  %v229 = vmul.f32 %v223, %v207
  %v230 = vmul.f32 %v225, %v207
  %v231 = vmul.f32 %v227, %v207
  %v232 = vadd.f32 %v228, 1e-05
  %v233 = vadd.f32 %v229, 1e-05
  %v234 = vadd.f32 %v230, 1e-05
  %v235 = vadd.f32 %v231, 1e-05
  %v236 = vrsqrt.pop %v232
  %v237 = vrsqrt.pop %v233
  %v238 = vrsqrt.pop %v234
  %v239 = vrsqrt.pop %v235
  %v240 = vmul.f32 %v212, %v236
  %v241 = vmul.f32 %v213, %v237
  %v242 = vmul.f32 %v214, %v238
  %v243 = vmul.f32 %v215, %v239
  %v244 = vld [vmem:[%s6] sm:$0xff]
  %v245 = vld [vmem:[%s6 + $0x8] sm:$0xff]
  %v246 = vld [vmem:[%s6 + $0x10] sm:$0xff]
  %v247 = vld [vmem:[%s6 + $0x18] sm:$0xff]
  %v248 = vld [vmem:[%s5] sm:$0x1]
  %v250 = vlaneseq
  %v251 = vshrl.u32 %v250, 7
  %v252 = vsub.s32 0, %v251
  %v253 = vrot.slane %v248, %v252
  %v255 = vmul.f32 %v240, %v253
  %v256 = vmul.f32 %v241, %v253
  %v257 = vmul.f32 %v242, %v253
  %v258 = vmul.f32 %v243, %v253
  %v259 = vadd.f32 %v255, %v244
  %v260 = vadd.f32 %v256, %v245
  %v261 = vadd.f32 %v257, %v246
  %v262 = vadd.f32 %v258, %v247
  %263 = vst [vmem:[%s7] sm:$0xff] %v259
  %264 = vst [vmem:[%s7 + $0x8] sm:$0xff] %v260
  %265 = vst [vmem:[%s7 + $0x10] sm:$0xff] %v261
  %266 = vst [vmem:[%s7 + $0x18] sm:$0xff] %v262
  // Predicated region
  $region30: #{image_embedder_forward.1} parent=0 // pred_check
    _
  $region31: #{image_embedder_forward.1} parent=0 // pred_check_branch
    %268 = sbr.rel (0) target = $region33
  $region32: #{image_embedder_forward.1} parent=0 // pred_region
    _
  $region33: #{image_embedder_forward.1} parent=0 // pred_fallthru
    _
  // Predicated region
  $region34: #{image_embedder_forward.1} parent=0 // pred_check
    _
  $region35: #{image_embedder_forward.1} parent=0 // pred_check_branch
    %270 = sbr.rel (0) target = $region37
  $region36: #{image_embedder_forward.1} parent=0 // pred_region
    _
  $region37: #{image_embedder_forward.1} parent=0 // pred_fallthru
    _

</llo_original>
